<compile_context>
chip_gen: v5e
topology: v5e:2x2
jax: 0.10.0
libtpu: 0.0.40
codegen_flags: <defaults>
</compile_context>

<pallas_src>
import functools

import jax
import jax.numpy as jnp
from jax.experimental import pallas as pl
from jax.experimental.pallas import tpu as pltpu


def _round_up(x: int, m: int) -> int:
    return -(-x // m) * m


def onn_kernel(x_ref, w0_ref, b0_ref, wcat_ref, bcat_ref, wlast_ref, blast_ref,
               out_ref):
    """One batch tile of the full ONN forward (packed-head output).

    x_ref    : (TILE_B, F)                   f32  input tile (cast in-kernel)
    w0_ref   : (F, H_pad)                    bf16 first hidden weight (in, out)
    b0_ref   : (1, H_pad)                    f32  first hidden bias
    wcat_ref : (L-1, H_pad, HEAD_PAD+H_pad)  bf16 fused [packed-head_i | hidden_{i+1}]
    bcat_ref : (L-1, 1, HEAD_PAD+H_pad)      f32  fused biases
    wlast_ref: (H_pad, HEAD_PAD)             bf16 last head (at its lane slice)
    blast_ref: (1, HEAD_PAD)                 f32  last head bias
    out_ref  : (TILE_B, HEAD_PAD)            f32  packed heads; head i lives in
                                                  lanes [i*C, (i+1)*C)
    """
    num_fused = wcat_ref.shape[0]          # = L - 1
    head_pad = out_ref.shape[-1]
    mm_dtype = w0_ref.dtype

    # In-kernel cast of the streamed input (no separate wrapper cast+copy
    # pass over X); bf16 MXU operands, f32 accumulate, f32 bias/ReLU epilogue.
    x = x_ref[...].astype(mm_dtype)
    h = jnp.maximum(
        jnp.dot(x, w0_ref[...], preferred_element_type=jnp.float32)
        + b0_ref[...],
        0.0,
    )

    # Packed-head accumulator: each layer's fused weight only populates its
    # own C-lane slice of the first HEAD_PAD lanes (exact zeros elsewhere),
    # so a plain add assembles all L heads into one lane-dense row.
    acc = jnp.zeros((out_ref.shape[0], head_pad), jnp.float32)

    # Static, small L (=3 here) -> unrolled.  For large L switch this to
    # lax.fori_loop with dynamic wcat_ref[i] indexing to bound live ranges.
    for i in range(num_fused):
        fused = (
            jnp.dot(h.astype(mm_dtype), wcat_ref[i],
                    preferred_element_type=jnp.float32)
            + bcat_ref[i]
        )
        acc = acc + fused[:, :head_pad]             # packed head_i contribution
        h = jnp.maximum(fused[:, head_pad:], 0.0)   # next hidden (f32 epilogue)

    # Last layer has no next hidden: standalone (packed) head matmul.
    acc = acc + (
        jnp.dot(h.astype(mm_dtype), wlast_ref[...],
                preferred_element_type=jnp.float32)
        + blast_ref[...]
    )
    out_ref[...] = acc                               # single full-lane store


def pack_onn_params(w0, b0, wh, bh, wo, bo, mm_dtype=jnp.bfloat16):
    """Repack ONN parameters for the fused kernel.

    Call ONCE per parameter set (hoisted out of the per-forward-call path).

    w0:(F,H)  b0:(1,H)  wh:(L-1,H,H)  bh:(L-1,1,H)  wo:(L,H,C)  bo:(L,1,C)
    (weights stored as (in_features, out_features), transposed vs PyTorch).

    mm_dtype: matmul-operand dtype.  jnp.bfloat16 (default) takes the MXU
    fast path with f32 accumulation; jnp.float32 is an exact-parity fallback.
    """
    L, H, C = wo.shape
    F = w0.shape[0]
    # The fused-head path needs a "next hidden" for every head except the
    # last one; max_num_hidden_layers == 1 is not supported by this kernel.
    assert L >= 2, "fused-head kernel requires max_num_hidden_layers >= 2"

    H_pad = _round_up(H, 128)           # lane-aligned hidden width
    HEAD_PAD = _round_up(L * C, 128)    # packed head row width (all L heads)

    f32 = jnp.float32
    # First hidden layer padded to H_pad output columns; zero cols + zero bias
    # give relu(0)=0, and the padded rows of later weights are zero, so the
    # padding is exactly inert.
    w0_p = jnp.zeros((F, H_pad), f32).at[:, :H].set(w0.astype(f32))
    b0_p = jnp.zeros((1, H_pad), f32).at[:, :H].set(b0.astype(f32))

    # Per-layer head placed at its own lane slice [i*C:(i+1)*C] of the packed
    # head block; zeros elsewhere so a plain add packs the output row.
    wo_pack = jnp.zeros((L, H_pad, HEAD_PAD), f32)
    bo_pack = jnp.zeros((L, 1, HEAD_PAD), f32)
    for i in range(L):
        wo_pack = wo_pack.at[i, :H, i * C:(i + 1) * C].set(wo[i].astype(f32))
        bo_pack = bo_pack.at[i, 0, i * C:(i + 1) * C].set(bo[i, 0].astype(f32))

    # Next-layer hidden weights padded to (H_pad, H_pad).
    wh_pad = jnp.zeros((L - 1, H_pad, H_pad), f32).at[:, :H, :H].set(
        wh.astype(f32))
    bh_pad = jnp.zeros((L - 1, 1, H_pad), f32).at[:, :, :H].set(bh.astype(f32))

    # Fused per-layer weight: one MXU matmul -> [packed head_i | hidden_{i+1}].
    wcat = jnp.concatenate([wo_pack[:L - 1], wh_pad], axis=-1).astype(mm_dtype)
    bcat = jnp.concatenate([bo_pack[:L - 1], bh_pad], axis=-1)        # f32
    wlast = wo_pack[L - 1].astype(mm_dtype)
    blast = bo_pack[L - 1]

    params = (w0_p.astype(mm_dtype), b0_p, wcat, bcat, wlast, blast)
    meta = dict(L=L, H=H, C=C, F=F, H_pad=H_pad, HEAD_PAD=HEAD_PAD)
    return params, meta


def onn_forward_packed(x, params, meta):
    """x: (B, F).  Returns (L, B, C) f32, matching torch.stack(output_class)."""
    w0_p, b0_p, wcat, bcat, wlast, blast = params
    L, C = meta["L"], meta["C"]
    H_pad, HEAD_PAD = meta["H_pad"], meta["HEAD_PAD"]
    B, F = x.shape
    assert F == meta["F"]

    # Batch tiling: big tiles amortize the ~0.35us per-grid-step overhead, but
    # keep >= 2 grid steps when the batch allows it so the "parallel" batch
    # axis can shard across v7x's two TensorCores.  VMEM is never a concern
    # here (out block at TILE_B=1024 is ~0.5 MiB; weights are KB-scale).
    B8 = _round_up(B, 8)
    if B8 >= 16:
        TILE_B = min(1024, _round_up(-(-B8 // 2), 8))
    else:
        TILE_B = 8
    B_pad = _round_up(B, TILE_B)

    x_f32 = x.astype(jnp.float32)
    if B_pad != B:
        x_f32 = jnp.zeros((B_pad, F), jnp.float32).at[:B].set(x_f32)

    grid = (B_pad // TILE_B,)

    # NOTE: streamed operands (x tile, out slab) are left at the default
    # double buffering; pipeline_mode=pl.Buffered(3) on those specs is a
    # possible further tweak when the grid has many steps.
    out = pl.pallas_call(
        onn_kernel,
        out_shape=jax.ShapeDtypeStruct((B_pad, HEAD_PAD), jnp.float32),
        grid=grid,
        in_specs=[
            pl.BlockSpec((TILE_B, F), lambda b: (b, 0)),         # x (streamed)
            pl.BlockSpec((F, H_pad), lambda b: (0, 0)),          # w0 (resident)
            pl.BlockSpec((1, H_pad), lambda b: (0, 0)),          # b0
            pl.BlockSpec((L - 1, H_pad, HEAD_PAD + H_pad),
                         lambda b: (0, 0, 0)),                   # fused W
            pl.BlockSpec((L - 1, 1, HEAD_PAD + H_pad),
                         lambda b: (0, 0, 0)),                   # fused b
            pl.BlockSpec((H_pad, HEAD_PAD), lambda b: (0, 0)),   # last head W
            pl.BlockSpec((1, HEAD_PAD), lambda b: (0, 0)),       # last head b
        ],
        out_specs=pl.BlockSpec((TILE_B, HEAD_PAD), lambda b: (b, 0)),
        compiler_params=pltpu.CompilerParams(
            dimension_semantics=("parallel",)),
    )(x_f32, w0_p, b0_p, wcat, bcat, wlast, blast)

    # Depad: contiguous lane slice of the packed slab, then a tiny (B, L, C)
    # reshape/transpose back to the PyTorch-matching (L, B, C) layout.
    return out[:B, :L * C].reshape(B, L, C).transpose(1, 0, 2)


def onn_reference(x, w0, b0, wh, bh, wo, bo):
    """Pure-JAX f32 reference mirroring the PyTorch forward."""
    L = wo.shape[0]
    hiddens = []
    h = jax.nn.relu(x @ w0 + b0[0])
    hiddens.append(h)
    for i in range(1, L):
        h = jax.nn.relu(h @ wh[i - 1] + bh[i - 1, 0])
        hiddens.append(h)
    outs = [hiddens[i] @ wo[i] + bo[i, 0] for i in range(L)]
    return jnp.stack(outs)


if __name__ == "__main__":
    # Shapes implied by the module: features_size=16, max_num_hidden_layers=3,
    # qtd_neuron_per_hidden_layer=32, n_classes=4, batch=2.
    F, L, H, C, B = 16, 3, 32, 4, 2

    key = jax.random.PRNGKey(0)
    keys = jax.random.split(key, 7)

    x = jax.random.normal(keys[0], (B, F), dtype=jnp.float32)

    # Deterministic synthetic parameters (stored as (in_features, out_features)).
    w0 = jax.random.normal(keys[1], (F, H), dtype=jnp.float32) * 0.1
    b0 = jax.random.normal(keys[2], (1, H), dtype=jnp.float32) * 0.1
    wh = jax.random.normal(keys[3], (L - 1, H, H), dtype=jnp.float32) * 0.1
    bh = jax.random.normal(keys[4], (L - 1, 1, H), dtype=jnp.float32) * 0.1
    wo = jax.random.normal(keys[5], (L, H, C), dtype=jnp.float32) * 0.1
    bo = jax.random.normal(keys[6], (L, 1, C), dtype=jnp.float32) * 0.1

    # Repack the weights once (hoisted out of the per-call path).
    params, meta = pack_onn_params(w0, b0, wh, bh, wo, bo)

    @jax.jit
    def fwd(x_in, packed):
        return onn_forward_packed(x_in, packed, meta)

    out = jax.block_until_ready(fwd(x, params))

    ref = onn_reference(x, w0, b0, wh, bh, wo, bo)
    assert out.shape == (L, B, C), out.shape
    # bf16 MXU operands (f32 accumulation) -> loosened tolerance vs f32 ref.
    # (pack_onn_params(..., mm_dtype=jnp.float32) is the exact-parity fallback.)
    assert jnp.allclose(out, ref, atol=2e-2, rtol=2e-2), "mismatch vs reference"

    print("KERNEL_OK")
</pallas_src>

<mosaic_0001>
module attributes {stable_mosaic.version = 11 : i64} {
  func.func @onn_kernel(%arg0: i32, %arg1: memref<8x16xf32, #tpu.memory_space<vmem>>, %arg2: memref<16x128xbf16, #tpu.memory_space<vmem>>, %arg3: memref<1x128xf32, #tpu.memory_space<vmem>>, %arg4: memref<2x128x256xbf16, #tpu.memory_space<vmem>>, %arg5: memref<2x1x256xf32, #tpu.memory_space<vmem>>, %arg6: memref<128x128xbf16, #tpu.memory_space<vmem>>, %arg7: memref<1x128xf32, #tpu.memory_space<vmem>>, %arg8: memref<8x128xf32, #tpu.memory_space<vmem>>) attributes {dimension_semantics = [#tpu.dimension_semantics<parallel>], iteration_bounds = array<i64: 1>, scalar_prefetch = 0 : i64, scratch_operands = 0 : i64, tpu.core_type = #tpu.core_type<tc>, window_params = [{transform_indices = @transform_0, window_bounds = array<i64: 8, 16>}, {pipeline_mode = #tpu.pipeline_mode<synchronous>, transform_indices = @transform_1, window_bounds = array<i64: 16, 128>}, {pipeline_mode = #tpu.pipeline_mode<synchronous>, transform_indices = @transform_2, window_bounds = array<i64: 1, 128>}, {pipeline_mode = #tpu.pipeline_mode<synchronous>, transform_indices = @transform_3, window_bounds = array<i64: 2, 128, 256>}, {pipeline_mode = #tpu.pipeline_mode<synchronous>, transform_indices = @transform_4, window_bounds = array<i64: 2, 1, 256>}, {pipeline_mode = #tpu.pipeline_mode<synchronous>, transform_indices = @transform_5, window_bounds = array<i64: 128, 128>}, {pipeline_mode = #tpu.pipeline_mode<synchronous>, transform_indices = @transform_6, window_bounds = array<i64: 1, 128>}, {transform_indices = @transform_7, window_bounds = array<i64: 8, 128>}]} {
    %c0 = arith.constant 0 : index
    %c0_0 = arith.constant 0 : index
    %0 = vector.load %arg1[%c0, %c0_0] : memref<8x16xf32, #tpu.memory_space<vmem>>, vector<8x16xf32>
    %1 = arith.truncf %0 : vector<8x16xf32> to vector<8x16xbf16>
    %c0_1 = arith.constant 0 : index
    %c0_2 = arith.constant 0 : index
    %2 = vector.load %arg2[%c0_1, %c0_2] : memref<16x128xbf16, #tpu.memory_space<vmem>>, vector<16x128xbf16>
    %cst = arith.constant dense<0.000000e+00> : vector<8x128xf32>
    %3 = tpu.matmul %1, %2, %cst {dimension_numbers = #tpu.dot_dimension_numbers<[1], [0], [0], [1], [0, 0, 1, 1], [], []>} : vector<8x16xbf16>, vector<16x128xbf16>, vector<8x128xf32> -> vector<8x128xf32>
    %c0_3 = arith.constant 0 : index
    %c0_4 = arith.constant 0 : index
    %4 = vector.load %arg3[%c0_3, %c0_4] : memref<1x128xf32, #tpu.memory_space<vmem>>, vector<1x128xf32>
    %5 = vector.broadcast %4 : vector<1x128xf32> to vector<8x128xf32>
    %6 = arith.addf %3, %5 : vector<8x128xf32>
    %cst_5 = arith.constant 0.000000e+00 : f32
    %7 = vector.broadcast %cst_5 : f32 to vector<8x128xf32>
    %8 = arith.maximumf %6, %7 : vector<8x128xf32>
    %cst_6 = arith.constant 0.000000e+00 : f32
    %9 = vector.broadcast %cst_6 : f32 to vector<8x128xf32>
    %10 = arith.truncf %8 : vector<8x128xf32> to vector<8x128xbf16>
    %c0_7 = arith.constant 0 : index
    %c0_8 = arith.constant 0 : index
    %c0_9 = arith.constant 0 : index
    %11 = vector.load %arg4[%c0_7, %c0_8, %c0_9] : memref<2x128x256xbf16, #tpu.memory_space<vmem>>, vector<1x128x256xbf16>
    %12 = vector.shape_cast %11 : vector<1x128x256xbf16> to vector<128x256xbf16>
    %cst_10 = arith.constant dense<0.000000e+00> : vector<8x256xf32>
    %13 = tpu.matmul %10, %12, %cst_10 {dimension_numbers = #tpu.dot_dimension_numbers<[1], [0], [0], [1], [0, 0, 1, 1], [], []>} : vector<8x128xbf16>, vector<128x256xbf16>, vector<8x256xf32> -> vector<8x256xf32>
    %c0_11 = arith.constant 0 : index
    %c0_12 = arith.constant 0 : index
    %c0_13 = arith.constant 0 : index
    %14 = vector.load %arg5[%c0_11, %c0_12, %c0_13] : memref<2x1x256xf32, #tpu.memory_space<vmem>>, vector<1x1x256xf32>
    %15 = vector.shape_cast %14 : vector<1x1x256xf32> to vector<1x256xf32>
    %16 = vector.broadcast %15 : vector<1x256xf32> to vector<8x256xf32>
    %17 = arith.addf %13, %16 : vector<8x256xf32>
    %18 = vector.extract_strided_slice %17 {offsets = [0, 0], sizes = [8, 128], strides = [1, 1]} : vector<8x256xf32> to vector<8x128xf32>
    %19 = arith.addf %9, %18 : vector<8x128xf32>
    %20 = vector.extract_strided_slice %17 {offsets = [0, 128], sizes = [8, 128], strides = [1, 1]} : vector<8x256xf32> to vector<8x128xf32>
    %cst_14 = arith.constant 0.000000e+00 : f32
    %21 = vector.broadcast %cst_14 : f32 to vector<8x128xf32>
    %22 = arith.maximumf %20, %21 : vector<8x128xf32>
    %23 = arith.truncf %22 : vector<8x128xf32> to vector<8x128xbf16>
    %c1 = arith.constant 1 : index
    %c0_15 = arith.constant 0 : index
    %c0_16 = arith.constant 0 : index
    %24 = vector.load %arg4[%c1, %c0_15, %c0_16] : memref<2x128x256xbf16, #tpu.memory_space<vmem>>, vector<1x128x256xbf16>
    %25 = vector.shape_cast %24 : vector<1x128x256xbf16> to vector<128x256xbf16>
    %cst_17 = arith.constant dense<0.000000e+00> : vector<8x256xf32>
    %26 = tpu.matmul %23, %25, %cst_17 {dimension_numbers = #tpu.dot_dimension_numbers<[1], [0], [0], [1], [0, 0, 1, 1], [], []>} : vector<8x128xbf16>, vector<128x256xbf16>, vector<8x256xf32> -> vector<8x256xf32>
    %c1_18 = arith.constant 1 : index
    %c0_19 = arith.constant 0 : index
    %c0_20 = arith.constant 0 : index
    %27 = vector.load %arg5[%c1_18, %c0_19, %c0_20] : memref<2x1x256xf32, #tpu.memory_space<vmem>>, vector<1x1x256xf32>
    %28 = vector.shape_cast %27 : vector<1x1x256xf32> to vector<1x256xf32>
    %29 = vector.broadcast %28 : vector<1x256xf32> to vector<8x256xf32>
    %30 = arith.addf %26, %29 : vector<8x256xf32>
    %31 = vector.extract_strided_slice %30 {offsets = [0, 0], sizes = [8, 128], strides = [1, 1]} : vector<8x256xf32> to vector<8x128xf32>
    %32 = arith.addf %19, %31 : vector<8x128xf32>
    %33 = vector.extract_strided_slice %30 {offsets = [0, 128], sizes = [8, 128], strides = [1, 1]} : vector<8x256xf32> to vector<8x128xf32>
    %cst_21 = arith.constant 0.000000e+00 : f32
    %34 = vector.broadcast %cst_21 : f32 to vector<8x128xf32>
    %35 = arith.maximumf %33, %34 : vector<8x128xf32>
    %36 = arith.truncf %35 : vector<8x128xf32> to vector<8x128xbf16>
    %c0_22 = arith.constant 0 : index
    %c0_23 = arith.constant 0 : index
    %37 = vector.load %arg6[%c0_22, %c0_23] : memref<128x128xbf16, #tpu.memory_space<vmem>>, vector<128x128xbf16>
    %cst_24 = arith.constant dense<0.000000e+00> : vector<8x128xf32>
    %38 = tpu.matmul %36, %37, %cst_24 {dimension_numbers = #tpu.dot_dimension_numbers<[1], [0], [0], [1], [0, 0, 1, 1], [], []>} : vector<8x128xbf16>, vector<128x128xbf16>, vector<8x128xf32> -> vector<8x128xf32>
    %c0_25 = arith.constant 0 : index
    %c0_26 = arith.constant 0 : index
    %39 = vector.load %arg7[%c0_25, %c0_26] : memref<1x128xf32, #tpu.memory_space<vmem>>, vector<1x128xf32>
    %40 = vector.broadcast %39 : vector<1x128xf32> to vector<8x128xf32>
    %41 = arith.addf %38, %40 : vector<8x128xf32>
    %42 = arith.addf %32, %41 : vector<8x128xf32>
    %c0_27 = arith.constant 0 : index
    %c0_28 = arith.constant 0 : index
    %43 = vector.load %arg8[%c0_27, %c0_28] : memref<8x128xf32, #tpu.memory_space<vmem>>, vector<8x128xf32>
    tpu.vector_store %arg8[%c0_27, %c0_28], %42 {strides = array<i32>} : memref<8x128xf32, #tpu.memory_space<vmem>>, vector<8x128xf32>,
    return
  }
  func.func @transform_0(%arg0: i32) -> (i32, i32) {
    %c0_i32 = arith.constant 0 : i32
    %c0_i32_0 = arith.constant 0 : i32
    return %arg0, %c0_i32 : i32, i32
  }
  func.func @transform_1(%arg0: i32) -> (i32, i32) {
    %c0_i32 = arith.constant 0 : i32
    %c0_i32_0 = arith.constant 0 : i32
    %c0_i32_1 = arith.constant 0 : i32
    return %c0_i32, %c0_i32_0 : i32, i32
  }
  func.func @transform_2(%arg0: i32) -> (i32, i32) {
    %c0_i32 = arith.constant 0 : i32
    %c0_i32_0 = arith.constant 0 : i32
    %c0_i32_1 = arith.constant 0 : i32
    return %c0_i32, %c0_i32_0 : i32, i32
  }
  func.func @transform_3(%arg0: i32) -> (i32, i32, i32) {
    %c0_i32 = arith.constant 0 : i32
    %c0_i32_0 = arith.constant 0 : i32
    %c0_i32_1 = arith.constant 0 : i32
    %c0_i32_2 = arith.constant 0 : i32
    return %c0_i32, %c0_i32_0, %c0_i32_1 : i32, i32, i32
  }
  func.func @transform_4(%arg0: i32) -> (i32, i32, i32) {
    %c0_i32 = arith.constant 0 : i32
    %c0_i32_0 = arith.constant 0 : i32
    %c0_i32_1 = arith.constant 0 : i32
    %c0_i32_2 = arith.constant 0 : i32
    return %c0_i32, %c0_i32_0, %c0_i32_1 : i32, i32, i32
  }
  func.func @transform_5(%arg0: i32) -> (i32, i32) {
    %c0_i32 = arith.constant 0 : i32
    %c0_i32_0 = arith.constant 0 : i32
    %c0_i32_1 = arith.constant 0 : i32
    return %c0_i32, %c0_i32_0 : i32, i32
  }
  func.func @transform_6(%arg0: i32) -> (i32, i32) {
    %c0_i32 = arith.constant 0 : i32
    %c0_i32_0 = arith.constant 0 : i32
    %c0_i32_1 = arith.constant 0 : i32
    return %c0_i32, %c0_i32_0 : i32, i32
  }
  func.func @transform_7(%arg0: i32) -> (i32, i32) {
    %c0_i32 = arith.constant 0 : i32
    %c0_i32_0 = arith.constant 0 : i32
    return %arg0, %c0_i32 : i32, i32
  }
}

</mosaic_0001>

<llo_original>
// kernel: fwd.1
$region0: #{fwd.1}
  #allocation0 [shape = 'u32[]', space=smem, size = 0x4, offset = 0x4, fixed_abs, tag = 'smem constant byte address 0x4 - core index']
  #allocation1 [shape = 'u32[72,128]{1,0:T(1,128)}', space=vmem, size = 0x9000, scoped, tag = 'internal scratch']
  %s0 = inlined_call_operand.vmem [shape: f32[8,16], index: 0, kind: input, shape index: {}]
  %s1 = inlined_call_operand.vmem [shape: bf16[16,128], index: 1, kind: input, shape index: {}]
  %s2 = inlined_call_operand.hbm [shape: f32[1,128], index: 2, kind: input, shape index: {}]
  %s3 = inlined_call_operand.hbm [shape: bf16[2,128,256], index: 3, kind: input, shape index: {}]
  %s4 = inlined_call_operand.vmem [shape: f32[2,1,256], index: 4, kind: input, shape index: {}]
  %s5 = inlined_call_operand.hbm [shape: bf16[128,128], index: 5, kind: input, shape index: {}]
  %s6 = inlined_call_operand.vmem [shape: f32[1,128], index: 6, kind: input, shape index: {}]
  %s7 = inlined_call_operand.vmem [shape: f32[8,128], index: 7, kind: output, shape index: {}]
  %s8 = sld [smem:[#allocation0]]
  $region50: #{fwd.1} parent=0
    _
  %s10 = ssub.s32 1, %s8
  %s11 = scalar_select 0, %s10, %s8
  $region1: #{fwd.1} parent=0
    #allocation2 [shape = 'u8[512]{0}', space=vmem, size = 0x400, scoped, tag = 'input window, operand 2, single buffered']
    #allocation3 [shape = 's32[1]{0}', space=sflag, size = 0x4, scoped, tag = 'scoped memory for fwd.1']
    #allocation4 [shape = 'u8[131072]{0}', space=vmem, size = 0x20000, scoped, tag = 'input window, operand 3, single buffered']
    #allocation5 [shape = 's32[1]{0}', space=sflag, size = 0x4, scoped, tag = 'scoped memory for fwd.1']
    #allocation6 [shape = 'u8[32768]{0}', space=vmem, size = 0x8000, scoped, tag = 'input window, operand 5, single buffered']
    %12 = vsyncpa [#allocation3], 0
    %13 = vsyncpa [#allocation5], 0
    // Predicated region
    $region2: #{fwd.1} parent=1 // pred_check
      _
    $region3: #{fwd.1} parent=1 // pred_check_branch
      %15 = sbr.rel (0) target = $region5
    $region4: #{fwd.1} parent=1 // pred_region
      _
    $region5: #{fwd.1} parent=1 // pred_fallthru
      _
    // Predicated region
    $region6: #{fwd.1} parent=1 // pred_check
      _
    $region7: #{fwd.1} parent=1 // pred_check_branch
      %17 = sbr.rel (0) target = $region9
    $region8: #{fwd.1} parent=1 // pred_region
      _
    $region9: #{fwd.1} parent=1 // pred_fallthru
      _
    // Predicated region
    $region10: #{fwd.1} parent=1 // pred_check
      _
    $region11: #{fwd.1} parent=1 // pred_check_branch
      %19 = sbr.rel (0) target = $region13
    $region12: #{fwd.1} parent=1 // pred_region
      %21 = vsyncadd [#allocation3], 0
      %s23 = sshll.u32 %s2, 4
      %s24 = int_to_ptr.hbm [resolvable:$true] %s23
      %s25 = sshll.u32 [#allocation2], 4
      %s26 = int_to_ptr.vmem [resolvable:$true] %s25
      %28 = dma.hbm_to_vmem [thread:$0]  %s24, 16, %s26, [#allocation3]
    $region13: #{fwd.1} parent=1 // pred_fallthru
      _
    // Predicated region
    $region14: #{fwd.1} parent=1 // pred_check
      _
    $region15: #{fwd.1} parent=1 // pred_check_branch
      %30 = sbr.rel (0) target = $region17
    $region16: #{fwd.1} parent=1 // pred_region
      %32 = vsyncadd [#allocation5], 0
      %s33 = sshll.u32 %s3, 4
      %s34 = int_to_ptr.hbm [resolvable:$true] %s33
      %s35 = sshll.u32 [#allocation4], 4
      %s36 = int_to_ptr.vmem [resolvable:$true] %s35
      %41 = dma.hbm_to_vmem [thread:$0]  %s34, 4096, %s36, [#allocation5], 128, 128, 8
    $region17: #{fwd.1} parent=1 // pred_fallthru
      _
    // Predicated region
    $region18: #{fwd.1} parent=1 // pred_check
      _
    $region19: #{fwd.1} parent=1 // pred_check_branch
      %43 = sbr.rel (0) target = $region21
    $region20: #{fwd.1} parent=1 // pred_region
      _
    $region21: #{fwd.1} parent=1 // pred_fallthru
      _
    // Predicated region
    $region22: #{fwd.1} parent=1 // pred_check
      _
    $region23: #{fwd.1} parent=1 // pred_check_branch
      %45 = sbr.rel (0) target = $region25
    $region24: #{fwd.1} parent=1 // pred_region
      %47 = vsyncadd [#allocation5], 0
      %s48 = sshll.u32 %s5, 4
      %s49 = int_to_ptr.hbm [resolvable:$true] %s48
      %s50 = sshll.u32 [#allocation6], 4
      %s51 = int_to_ptr.vmem [resolvable:$true] %s50
      %56 = dma.hbm_to_vmem [thread:$0]  %s49, 1024, %s51, [#allocation5], 64, 64, 4
    $region25: #{fwd.1} parent=1 // pred_fallthru
      _
    // Predicated region
    $region26: #{fwd.1} parent=1 // pred_check
      _
    $region27: #{fwd.1} parent=1 // pred_check_branch
      %58 = sbr.rel (0) target = $region29
    $region28: #{fwd.1} parent=1 // pred_region
      _
    $region29: #{fwd.1} parent=1 // pred_fallthru
      _
    // Predicated region
    $region30: #{fwd.1} parent=1 // pred_check
      _
    $region31: #{fwd.1} parent=1 // pred_check_branch
      %60 = sbr.rel (0) target = $region33
    $region32: #{fwd.1} parent=1 // pred_region
      %62 = dma.done [#allocation3], 16
    $region33: #{fwd.1} parent=1 // pred_fallthru
      _
    // Predicated region
    $region34: #{fwd.1} parent=1 // pred_check
      _
    $region35: #{fwd.1} parent=1 // pred_check_branch
      %64 = sbr.rel (0) target = $region37
    $region36: #{fwd.1} parent=1 // pred_region
      %66 = dma.done [#allocation5], 4096
    $region37: #{fwd.1} parent=1 // pred_fallthru
      _
    // Predicated region
    $region38: #{fwd.1} parent=1 // pred_check
      _
    $region39: #{fwd.1} parent=1 // pred_check_branch
      %68 = sbr.rel (0) target = $region41
    $region40: #{fwd.1} parent=1 // pred_region
      %70 = dma.done [#allocation5], 1024
    $region41: #{fwd.1} parent=1 // pred_fallthru
      _
    %v72 = vld [vmem:[%s0] sm:$0xff]
    %v73 = vpack.c.bf16 %v72, %v72
    %v74 = vld [vmem:[%s1] sm:$0xf]
    %v75 = vld [vmem:[%s1 + $0x4] sm:$0xf]
    %v76 = vld [vmem:[#allocation2] sm:$0x1]
    %v78 = vperm.slane %v76, 0
    %v82 = vunpack.c.l.b16 %v74
    %v83 = vunpack.c.l.b16 %v75
    %v84 = vpack.c.b16 %v83, %v82
    %vm86 = vcmask 130048
    %v88 = vsel %vm86, %v73, 0
    %90 = vmatpush.bf16.msra.mxu0 0
    %91 = vmatpush.bf16.msra.mxu0 0
    %92 = vmatpush.bf16.msra.mxu0 0
    %93 = vmatpush.bf16.msra.mxu0 0
    %94 = vmatpush.bf16.msra.mxu0 0
    %95 = vmatpush.bf16.msra.mxu0 0
    %96 = vmatpush.bf16.msra.mxu0 0
    %97 = vmatpush.bf16.msra.mxu0 %v84
    %98 = vmatmul.bf16.gmra.mxu0 %v88
    %v99 = vpop.f32.mrf.mxu0
    %v100 = vadd.f32 %v78, %v99
    %v101 = vpop.f32.mrf.mxu0
    %102 = vdwg.mxu0
    %v103 = vmax.f32 %v100, 0.0
    %v104 = vpack.c.bf16 %v103, %v103
    %v105 = vld [vmem:[#allocation4] sm:$0xff]
    %v106 = vld [vmem:[#allocation4 + $0x8] sm:$0xff]
    %v107 = vld [vmem:[#allocation4 + $0x10] sm:$0xff]
    %v108 = vld [vmem:[#allocation4 + $0x18] sm:$0xff]
    %v109 = vld [vmem:[#allocation4 + $0x20] sm:$0xff]
    %v110 = vld [vmem:[#allocation4 + $0x28] sm:$0xff]
    %v111 = vld [vmem:[#allocation4 + $0x30] sm:$0xff]
    %v112 = vld [vmem:[#allocation4 + $0x38] sm:$0xff]
    %v113 = vld [vmem:[#allocation4 + $0x40] sm:$0xff]
    %v114 = vld [vmem:[#allocation4 + $0x48] sm:$0xff]
    %v115 = vld [vmem:[#allocation4 + $0x50] sm:$0xff]
    %v116 = vld [vmem:[#allocation4 + $0x58] sm:$0xff]
    %v117 = vld [vmem:[#allocation4 + $0x60] sm:$0xff]
    %v118 = vld [vmem:[#allocation4 + $0x68] sm:$0xff]
    %v119 = vld [vmem:[#allocation4 + $0x70] sm:$0xff]
    %v120 = vld [vmem:[#allocation4 + $0x78] sm:$0xff]
    %v121 = vld [vmem:[%s4] sm:$0x3]
    %v123 = vperm.slane %v121, 0
    %v124 = vperm.slane %v121, 1
    %v143 = vunpack.c.l.b16 %v105
    %v144 = vunpack.c.h.b16 %v105
    %v145 = vunpack.c.l.b16 %v106
    %v146 = vunpack.c.h.b16 %v106
    %v147 = vunpack.c.l.b16 %v107
    %v148 = vunpack.c.h.b16 %v107
    %v149 = vunpack.c.l.b16 %v108
    %v150 = vunpack.c.h.b16 %v108
    %v151 = vunpack.c.l.b16 %v109
    %v152 = vunpack.c.h.b16 %v109
    %v153 = vunpack.c.l.b16 %v110
    %v154 = vunpack.c.h.b16 %v110
    %v155 = vunpack.c.l.b16 %v111
    %v156 = vunpack.c.h.b16 %v111
    %v157 = vunpack.c.l.b16 %v112
    %v158 = vunpack.c.h.b16 %v112
    %v159 = vunpack.c.l.b16 %v113
    %v160 = vunpack.c.h.b16 %v113
    %v161 = vunpack.c.l.b16 %v114
    %v162 = vunpack.c.h.b16 %v114
    %v163 = vunpack.c.l.b16 %v115
    %v164 = vunpack.c.h.b16 %v115
    %v165 = vunpack.c.l.b16 %v116
    %v166 = vunpack.c.h.b16 %v116
    %v167 = vunpack.c.l.b16 %v117
    %v168 = vunpack.c.h.b16 %v117
    %v169 = vunpack.c.l.b16 %v118
    %v170 = vunpack.c.h.b16 %v118
    %v171 = vunpack.c.l.b16 %v119
    %v172 = vunpack.c.h.b16 %v119
    %v173 = vunpack.c.l.b16 %v120
    %v174 = vunpack.c.h.b16 %v120
    %v175 = vpack.c.b16 %v145, %v143
    %v176 = vpack.c.b16 %v146, %v144
    %v177 = vpack.c.b16 %v149, %v147
    %v178 = vpack.c.b16 %v150, %v148
    %v179 = vpack.c.b16 %v153, %v151
    %v180 = vpack.c.b16 %v154, %v152
    %v181 = vpack.c.b16 %v157, %v155
    %v182 = vpack.c.b16 %v158, %v156
    %v183 = vpack.c.b16 %v161, %v159
    %v184 = vpack.c.b16 %v162, %v160
    %v185 = vpack.c.b16 %v165, %v163
    %v186 = vpack.c.b16 %v166, %v164
    %v187 = vpack.c.b16 %v169, %v167
    %v188 = vpack.c.b16 %v170, %v168
    %v189 = vpack.c.b16 %v173, %v171
    %v190 = vpack.c.b16 %v174, %v172
    %207 = vmatpush.bf16.msra.mxu0 %v189
    %208 = vmatpush.bf16.msra.mxu0 %v187
    %209 = vmatpush.bf16.msra.mxu0 %v185
    %210 = vmatpush.bf16.msra.mxu0 %v183
    %211 = vmatpush.bf16.msra.mxu0 %v181
    %212 = vmatpush.bf16.msra.mxu0 %v179
    %213 = vmatpush.bf16.msra.mxu0 %v177
    %214 = vmatpush.bf16.msra.mxu0 %v175
    %215 = vmatmul.bf16.gmra.mxu0 %v104
    %v216 = vpop.f32.mrf.mxu0
    %v217 = vadd.f32 %v123, %v216
    %v218 = vpop.f32.mrf.mxu0
    %219 = vdwg.mxu0
    %220 = vmatpush.bf16.msra.mxu0 %v190
    %221 = vmatpush.bf16.msra.mxu0 %v188
    %222 = vmatpush.bf16.msra.mxu0 %v186
    %223 = vmatpush.bf16.msra.mxu0 %v184
    %224 = vmatpush.bf16.msra.mxu0 %v182
    %225 = vmatpush.bf16.msra.mxu0 %v180
    %226 = vmatpush.bf16.msra.mxu0 %v178
    %227 = vmatpush.bf16.msra.mxu0 %v176
    %228 = vmatmul.bf16.gmra.mxu0 %v104
    %v229 = vpop.f32.mrf.mxu0
    %v230 = vadd.f32 %v124, %v229
    %v231 = vpop.f32.mrf.mxu0
    %232 = vdwg.mxu0
    %v233 = vadd.f32 %v217, 0.0
    %v234 = vmax.f32 %v230, 0.0
    %v235 = vpack.c.bf16 %v234, %v234
    %s236 = scalar_lea.vmem [#allocation4], 128
    %v237 = vld [vmem:[%s236] sm:$0xff]
    %v238 = vld [vmem:[%s236 + $0x8] sm:$0xff]
    %v239 = vld [vmem:[%s236 + $0x10] sm:$0xff]
    %v240 = vld [vmem:[%s236 + $0x18] sm:$0xff]
    %v241 = vld [vmem:[%s236 + $0x20] sm:$0xff]
    %v242 = vld [vmem:[%s236 + $0x28] sm:$0xff]
    %v243 = vld [vmem:[%s236 + $0x30] sm:$0xff]
    %v244 = vld [vmem:[%s236 + $0x38] sm:$0xff]
    %v245 = vld [vmem:[%s236 + $0x40] sm:$0xff]
    %v246 = vld [vmem:[%s236 + $0x48] sm:$0xff]
    %v247 = vld [vmem:[%s236 + $0x50] sm:$0xff]
    %v248 = vld [vmem:[%s236 + $0x58] sm:$0xff]
    %v249 = vld [vmem:[%s236 + $0x60] sm:$0xff]
    %v250 = vld [vmem:[%s236 + $0x68] sm:$0xff]
    %v251 = vld [vmem:[%s236 + $0x70] sm:$0xff]
    %v252 = vld [vmem:[%s236 + $0x78] sm:$0xff]
    %s253 = scalar_lea.vmem %s4, 2
    %v254 = vld [vmem:[%s253] sm:$0x3]
    %v256 = vperm.slane %v254, 0
    %v257 = vperm.slane %v254, 1
    %v276 = vunpack.c.l.b16 %v237
    %v277 = vunpack.c.h.b16 %v237
    %v278 = vunpack.c.l.b16 %v238
    %v279 = vunpack.c.h.b16 %v238
    %v280 = vunpack.c.l.b16 %v239
    %v281 = vunpack.c.h.b16 %v239
    %v282 = vunpack.c.l.b16 %v240
    %v283 = vunpack.c.h.b16 %v240
    %v284 = vunpack.c.l.b16 %v241
    %v285 = vunpack.c.h.b16 %v241
    %v286 = vunpack.c.l.b16 %v242
    %v287 = vunpack.c.h.b16 %v242
    %v288 = vunpack.c.l.b16 %v243
    %v289 = vunpack.c.h.b16 %v243
    %v290 = vunpack.c.l.b16 %v244
    %v291 = vunpack.c.h.b16 %v244
    %v292 = vunpack.c.l.b16 %v245
    %v293 = vunpack.c.h.b16 %v245
    %v294 = vunpack.c.l.b16 %v246
    %v295 = vunpack.c.h.b16 %v246
    %v296 = vunpack.c.l.b16 %v247
    %v297 = vunpack.c.h.b16 %v247
    %v298 = vunpack.c.l.b16 %v248
    %v299 = vunpack.c.h.b16 %v248
    %v300 = vunpack.c.l.b16 %v249
    %v301 = vunpack.c.h.b16 %v249
    %v302 = vunpack.c.l.b16 %v250
    %v303 = vunpack.c.h.b16 %v250
    %v304 = vunpack.c.l.b16 %v251
    %v305 = vunpack.c.h.b16 %v251
    %v306 = vunpack.c.l.b16 %v252
    %v307 = vunpack.c.h.b16 %v252
    %v308 = vpack.c.b16 %v278, %v276
    %v309 = vpack.c.b16 %v279, %v277
    %v310 = vpack.c.b16 %v282, %v280
    %v311 = vpack.c.b16 %v283, %v281
    %v312 = vpack.c.b16 %v286, %v284
    %v313 = vpack.c.b16 %v287, %v285
    %v314 = vpack.c.b16 %v290, %v288
    %v315 = vpack.c.b16 %v291, %v289
    %v316 = vpack.c.b16 %v294, %v292
    %v317 = vpack.c.b16 %v295, %v293
    %v318 = vpack.c.b16 %v298, %v296
    %v319 = vpack.c.b16 %v299, %v297
    %v320 = vpack.c.b16 %v302, %v300
    %v321 = vpack.c.b16 %v303, %v301
    %v322 = vpack.c.b16 %v306, %v304
    %v323 = vpack.c.b16 %v307, %v305
    %340 = vmatpush.bf16.msra.mxu0 %v322
    %341 = vmatpush.bf16.msra.mxu0 %v320
    %342 = vmatpush.bf16.msra.mxu0 %v318
    %343 = vmatpush.bf16.msra.mxu0 %v316
    %344 = vmatpush.bf16.msra.mxu0 %v314
    %345 = vmatpush.bf16.msra.mxu0 %v312
    %346 = vmatpush.bf16.msra.mxu0 %v310
    %347 = vmatpush.bf16.msra.mxu0 %v308
    %348 = vmatmul.bf16.gmra.mxu0 %v235
    %v349 = vpop.f32.mrf.mxu0
    %v350 = vadd.f32 %v256, %v349
    %v351 = vpop.f32.mrf.mxu0
    %352 = vdwg.mxu0
    %353 = vmatpush.bf16.msra.mxu0 %v323
    %354 = vmatpush.bf16.msra.mxu0 %v321
    %355 = vmatpush.bf16.msra.mxu0 %v319
    %356 = vmatpush.bf16.msra.mxu0 %v317
    %357 = vmatpush.bf16.msra.mxu0 %v315
    %358 = vmatpush.bf16.msra.mxu0 %v313
    %359 = vmatpush.bf16.msra.mxu0 %v311
    %360 = vmatpush.bf16.msra.mxu0 %v309
    %361 = vmatmul.bf16.gmra.mxu0 %v235
    %v362 = vpop.f32.mrf.mxu0
    %v363 = vadd.f32 %v257, %v362
    %v364 = vpop.f32.mrf.mxu0
    %365 = vdwg.mxu0
    %v366 = vadd.f32 %v233, %v350
    %v367 = vmax.f32 %v363, 0.0
    %v368 = vpack.c.bf16 %v367, %v367
    %v369 = vld [vmem:[#allocation6] sm:$0xf]
    %v370 = vld [vmem:[#allocation6 + $0x4] sm:$0xf]
    %v371 = vld [vmem:[#allocation6 + $0x8] sm:$0xf]
    %v372 = vld [vmem:[#allocation6 + $0xc] sm:$0xf]
    %v373 = vld [vmem:[#allocation6 + $0x10] sm:$0xf]
    %v374 = vld [vmem:[#allocation6 + $0x14] sm:$0xf]
    %v375 = vld [vmem:[#allocation6 + $0x18] sm:$0xf]
    %v376 = vld [vmem:[#allocation6 + $0x1c] sm:$0xf]
    %v377 = vld [vmem:[#allocation6 + $0x20] sm:$0xf]
    %v378 = vld [vmem:[#allocation6 + $0x24] sm:$0xf]
    %v379 = vld [vmem:[#allocation6 + $0x28] sm:$0xf]
    %v380 = vld [vmem:[#allocation6 + $0x2c] sm:$0xf]
    %v381 = vld [vmem:[#allocation6 + $0x30] sm:$0xf]
    %v382 = vld [vmem:[#allocation6 + $0x34] sm:$0xf]
    %v383 = vld [vmem:[#allocation6 + $0x38] sm:$0xf]
    %v384 = vld [vmem:[#allocation6 + $0x3c] sm:$0xf]
    %v385 = vld [vmem:[%s6] sm:$0x1]
    %v387 = vperm.slane %v385, 0
    %v405 = vunpack.c.l.b16 %v369
    %v406 = vunpack.c.l.b16 %v370
    %v407 = vunpack.c.l.b16 %v371
    %v408 = vunpack.c.l.b16 %v372
    %v409 = vunpack.c.l.b16 %v373
    %v410 = vunpack.c.l.b16 %v374
    %v411 = vunpack.c.l.b16 %v375
    %v412 = vunpack.c.l.b16 %v376
    %v413 = vunpack.c.l.b16 %v377
    %v414 = vunpack.c.l.b16 %v378
    %v415 = vunpack.c.l.b16 %v379
    %v416 = vunpack.c.l.b16 %v380
    %v417 = vunpack.c.l.b16 %v381
    %v418 = vunpack.c.l.b16 %v382
    %v419 = vunpack.c.l.b16 %v383
    %v420 = vunpack.c.l.b16 %v384
    %v421 = vpack.c.b16 %v406, %v405
    %v422 = vpack.c.b16 %v408, %v407
    %v423 = vpack.c.b16 %v410, %v409
    %v424 = vpack.c.b16 %v412, %v411
    %v425 = vpack.c.b16 %v414, %v413
    %v426 = vpack.c.b16 %v416, %v415
    %v427 = vpack.c.b16 %v418, %v417
    %v428 = vpack.c.b16 %v420, %v419
    %437 = vmatpush.bf16.msra.mxu0 %v428
    %438 = vmatpush.bf16.msra.mxu0 %v427
    %439 = vmatpush.bf16.msra.mxu0 %v426
    %440 = vmatpush.bf16.msra.mxu0 %v425
    %441 = vmatpush.bf16.msra.mxu0 %v424
    %442 = vmatpush.bf16.msra.mxu0 %v423
    %443 = vmatpush.bf16.msra.mxu0 %v422
    %444 = vmatpush.bf16.msra.mxu0 %v421
    %445 = vmatmul.bf16.gmra.mxu0 %v368
    %v446 = vpop.f32.mrf.mxu0
    %v447 = vadd.f32 %v387, %v446
    %v448 = vpop.f32.mrf.mxu0
    %449 = vdwg.mxu0
    %v450 = vadd.f32 %v366, %v447
    %451 = vst [vmem:[%s7] sm:$0xff] %v450
    // Predicated region
    $region42: #{fwd.1} parent=1 // pred_check
      _
    $region43: #{fwd.1} parent=1 // pred_check_branch
      %453 = sbr.rel (0) target = $region45
    $region44: #{fwd.1} parent=1 // pred_region
      _
    $region45: #{fwd.1} parent=1 // pred_fallthru
      _
    // Predicated region
    $region46: #{fwd.1} parent=1 // pred_check
      _
    $region47: #{fwd.1} parent=1 // pred_check_branch
      %455 = sbr.rel (0) target = $region49
    $region48: #{fwd.1} parent=1 // pred_region
      _
    $region49: #{fwd.1} parent=1 // pred_fallthru
      _
    %456 = vsyncpa [#allocation3], 1
    %457 = vsyncpa [#allocation5], 1

</llo_original>
